<compile_context>
chip_gen: v7x
topology: tpu7x:2x2x1
jax: 0.10.0
libtpu: 0.0.40
codegen_flags: <defaults>
</compile_context>

<pallas_src>
import jax
import jax.numpy as jnp
from jax.experimental import pallas as pl
from jax.experimental.pallas import tpu as pltpu


def _inner_product_decoder_kernel(zl_ref, zrt_ref, adj_ref):
    # zl_ref : (TM, D)  row block of z           -> output rows
    # zrt_ref: (D, TN)  column block of z.T      -> output columns
    acc = jax.lax.dot_general(
        zl_ref[...], zrt_ref[...],
        dimension_numbers=(((1,), (0,)), ((), ())),   # (TM,D) x (D,TN) -> (TM,TN)
        preferred_element_type=jnp.float32,
    )
    # Store-bound kernel: the lowered sigmoid (EUP exp + VPU divide) has slack.
    # TODO(synk): if stores ever stop being the bottleneck, switch to
    #             e = exp(-acc); pl.reciprocal(1 + e, approx=True).
    adj_ref[...] = jax.nn.sigmoid(acc).astype(adj_ref.dtype)


def _apply_dropout(z, dropout, training, key):
    """Mirror F.dropout(z, p, training): inverted dropout, identity in eval."""
    if not training or dropout <= 0.0:
        return z
    if key is None:
        raise ValueError(
            "training=True with dropout>0 requires an explicit PRNG key "
            "(torch.F.dropout draws fresh randomness each call).")
    keep = 1.0 - dropout
    mask = jax.random.bernoulli(key, keep, z.shape)
    return jnp.where(mask, z / keep, jnp.zeros_like(z)).astype(z.dtype)


def _pick_tile(n_pad, prefs):
    for t in prefs:
        if n_pad % t == 0:
            return t
    return n_pad  # n_pad is always a multiple of 128, so unreachable in practice


def inner_product_decoder_forward(z, dropout=0.0, training=False, key=None,
                                  *, compute_dtype=None, out_dtype=None):
    """adj = sigmoid(dropout(z) @ dropout(z).T) via a tiled Pallas kernel.

    compute_dtype: optional dtype for the matmul operands (e.g. jnp.bfloat16);
                   accumulation is always f32 on the MXU.
    out_dtype:     optional output dtype (e.g. jnp.bfloat16 to halve the
                   dominant HBM write traffic).  Defaults to z.dtype.
    """
    z = _apply_dropout(z, dropout, training, key)
    N, D = z.shape
    out_dtype = z.dtype if out_dtype is None else out_dtype

    zc = z if compute_dtype is None else z.astype(compute_dtype)

    # Pad N up to the next multiple of 128: keeps the lane-dense tiled fast
    # path for every N (padded rows are zeros; the padded region of the output
    # is sliced off below, so its sigmoid(0)=0.5 garbage never escapes).
    n_pad = max(128, pl.cdiv(N, 128) * 128)
    if n_pad != N:
        zc = jnp.pad(zc, ((0, n_pad - N), (0, 0)))

    # Large lane-dense tiles (write-bound workload).  256x512 f32 output,
    # double-buffered, is ~1 MiB of VMEM — fits every generation's scoped
    # default (v5e 16 MiB, v6e/v7x 32 MiB), so no vmem_limit override needed.
    tm = _pick_tile(n_pad, (256, 128))
    tn = _pick_tile(n_pad, (512, 256, 128))

    # One wrapper-side transpose (N*D elements, negligible) so the RHS reaches
    # the MXU in native (K, N) layout — no per-tile transpose inside the kernel.
    zt = zc.T  # (D, n_pad)

    grid = (n_pad // tm, n_pad // tn)

    adj = pl.pallas_call(
        _inner_product_decoder_kernel,
        out_shape=jax.ShapeDtypeStruct((n_pad, n_pad), out_dtype),
        grid=grid,
        in_specs=[
            pl.BlockSpec((tm, D), lambda i, j: (i, 0)),   # row block of z
            pl.BlockSpec((D, tn), lambda i, j: (0, j)),   # col block of z.T
        ],
        out_specs=pl.BlockSpec((tm, tn), lambda i, j: (i, j)),
        compiler_params=pltpu.CompilerParams(
            dimension_semantics=("parallel", "parallel"),
        ),
    )(zc, zt)

    if n_pad != N:
        adj = adj[:N, :N]
    return adj


def inner_product_decoder_reference(z, dropout=0.0, training=False, key=None):
    """Plain-JAX reference mirroring the PyTorch forward exactly."""
    z = _apply_dropout(z, dropout, training, key)
    return jax.nn.sigmoid(z @ z.T)


if __name__ == "__main__":
    # Small shapes consistent with the module: z is (num_nodes, latent_dim).
    N, D = 256, 32

    key = jax.random.PRNGKey(0)
    kz, kd, kz2 = jax.random.split(key, 3)
    z = jax.random.normal(kz, (N, D), jnp.float32)

    # 1) Eval mode (dropout identity), f32 end to end — must match reference.
    adj = inner_product_decoder_forward(z, dropout=0.0, training=False)
    adj = jax.block_until_ready(adj)
    ref = inner_product_decoder_reference(z, dropout=0.0, training=False)
    assert adj.shape == (N, N), adj.shape
    assert jnp.allclose(adj, ref, atol=1e-5, rtol=1e-5)

    # 2) Training mode: the dropout mask is applied once in the wrapper with
    #    the same key as the reference, so results must still match.
    adj_t = inner_product_decoder_forward(z, dropout=0.3, training=True, key=kd)
    adj_t = jax.block_until_ready(adj_t)
    ref_t = inner_product_decoder_reference(z, dropout=0.3, training=True, key=kd)
    assert jnp.allclose(adj_t, ref_t, atol=1e-5, rtol=1e-5)

    # 3) Odd N (not a multiple of 128) exercises the pad-and-slice path.
    N_odd = 200
    z_odd = jax.random.normal(kz2, (N_odd, D), jnp.float32)
    adj_o = inner_product_decoder_forward(z_odd)
    adj_o = jax.block_until_ready(adj_o)
    ref_o = inner_product_decoder_reference(z_odd)
    assert adj_o.shape == (N_odd, N_odd), adj_o.shape
    assert jnp.allclose(adj_o, ref_o, atol=1e-5, rtol=1e-5)

    # 4) bf16 compute operands + bf16 output (f32 accumulation inside): the
    #    fast/low-traffic configuration; checked against a bf16-cast reference
    #    with a tolerance appropriate for bf16 rounding.
    adj_b = inner_product_decoder_forward(
        z, compute_dtype=jnp.bfloat16, out_dtype=jnp.bfloat16)
    adj_b = jax.block_until_ready(adj_b)
    zb = z.astype(jnp.bfloat16)
    ref_b = jax.nn.sigmoid(
        jnp.dot(zb, zb.T, preferred_element_type=jnp.float32))
    assert adj_b.dtype == jnp.bfloat16
    assert jnp.allclose(adj_b.astype(jnp.float32), ref_b, atol=2e-2, rtol=2e-2)

    print("KERNEL_OK")
</pallas_src>

<mosaic_0001>
module attributes {stable_mosaic.version = 11 : i64} {
  func.func @_inner_product_decoder_kernel(%arg0: i32, %arg1: i32, %arg2: memref<256x32xf32, #tpu.memory_space<vmem>>, %arg3: memref<32x256xf32, #tpu.memory_space<vmem>>, %arg4: memref<256x256xf32, #tpu.memory_space<vmem>>) attributes {dimension_semantics = [#tpu.dimension_semantics<parallel>, #tpu.dimension_semantics<parallel>], iteration_bounds = array<i64: 1, 1>, scalar_prefetch = 0 : i64, scratch_operands = 0 : i64, tpu.core_type = #tpu.core_type<tc>, window_params = [{transform_indices = @transform_0, window_bounds = array<i64: 256, 32>}, {transform_indices = @transform_1, window_bounds = array<i64: 32, 256>}, {transform_indices = @transform_2, window_bounds = array<i64: 256, 256>}]} {
    %c0 = arith.constant 0 : index
    %c0_0 = arith.constant 0 : index
    %0 = vector.load %arg2[%c0, %c0_0] : memref<256x32xf32, #tpu.memory_space<vmem>>, vector<256x32xf32>
    %c0_1 = arith.constant 0 : index
    %c0_2 = arith.constant 0 : index
    %1 = vector.load %arg3[%c0_1, %c0_2] : memref<32x256xf32, #tpu.memory_space<vmem>>, vector<32x256xf32>
    %cst = arith.constant dense<0.000000e+00> : vector<256x256xf32>
    %2 = tpu.matmul %0, %1, %cst {dimension_numbers = #tpu.dot_dimension_numbers<[1], [0], [0], [1], [0, 0, 1, 1], [], []>} : vector<256x32xf32>, vector<32x256xf32>, vector<256x256xf32> -> vector<256x256xf32>
    %3 = arith.negf %2 : vector<256x256xf32>
    %4 = math.exp %3 : vector<256x256xf32>
    %cst_3 = arith.constant 1.000000e+00 : f32
    %5 = vector.broadcast %cst_3 : f32 to vector<256x256xf32>
    %6 = arith.addf %5, %4 : vector<256x256xf32>
    %7 = arith.divf %5, %6 : vector<256x256xf32>
    %c0_4 = arith.constant 0 : index
    %c0_5 = arith.constant 0 : index
    %8 = vector.load %arg4[%c0_4, %c0_5] : memref<256x256xf32, #tpu.memory_space<vmem>>, vector<256x256xf32>
    tpu.vector_store %arg4[%c0_4, %c0_5], %7 {strides = array<i32>} : memref<256x256xf32, #tpu.memory_space<vmem>>, vector<256x256xf32>,
    return
  }
  func.func @transform_0(%arg0: i32, %arg1: i32) -> (i32, i32) {
    %c0_i32 = arith.constant 0 : i32
    %c0_i32_0 = arith.constant 0 : i32
    return %arg0, %c0_i32 : i32, i32
  }
  func.func @transform_1(%arg0: i32, %arg1: i32) -> (i32, i32) {
    %c0_i32 = arith.constant 0 : i32
    %c0_i32_0 = arith.constant 0 : i32
    return %c0_i32, %arg1 : i32, i32
  }
  func.func @transform_2(%arg0: i32, %arg1: i32) -> (i32, i32) {
    %c0_i32 = arith.constant 0 : i32
    return %arg0, %arg1 : i32, i32
  }
}

</mosaic_0001>

<llo_original>
// kernel: tpu_custom_call.1
$region0: #{tpu_custom_call.1}
  #allocation0 [shape = 'u32[]', space=smem, size = 0x4, offset = 0x4, fixed_abs, tag = 'smem constant byte address 0x4 - core index']
  #allocation1 [shape = 'u32[144,128]{1,0:T(1,128)}', space=vmem, size = 0x12000, scoped, tag = 'internal scratch']
  %s0 = inlined_call_operand.vmem [shape: f32[256,32], index: 0, kind: input, shape index: {}]
  %s1 = inlined_call_operand.vmem [shape: f32[32,256], index: 1, kind: input, shape index: {}]
  %s2 = inlined_call_operand.hbm [shape: f32[256,256], index: 2, kind: output, shape index: {}]
  %s3 = sld [smem:[#allocation0]]
  $region18: #{tpu_custom_call.1} parent=0
    _
  %s5 = ssub.s32 1, %s3
  %s6 = scalar_select 0, %s5, %s3
  $region1: #{tpu_custom_call.1} parent=0
    #allocation2 [shape = 'u8[262144]{0}', space=vmem, size = 0x40000, scoped, tag = 'output window, operand 0, single buffered']
    #allocation3 [shape = 's32[1]{0}', space=sflag, size = 0x4, scoped, tag = 'scoped memory for tpu_custom_call.1']
    %7 = vsyncpa [#allocation3], 0
    // Predicated region
    $region2: #{tpu_custom_call.1} parent=1 // pred_check
      _
    $region3: #{tpu_custom_call.1} parent=1 // pred_check_branch
      %9 = sbr.rel (0) target = $region5
    $region4: #{tpu_custom_call.1} parent=1 // pred_region
      _
    $region5: #{tpu_custom_call.1} parent=1 // pred_fallthru
      _
    // Predicated region
    $region6: #{tpu_custom_call.1} parent=1 // pred_check
      _
    $region7: #{tpu_custom_call.1} parent=1 // pred_check_branch
      %11 = sbr.rel (0) target = $region9
    $region8: #{tpu_custom_call.1} parent=1 // pred_region
      _
    $region9: #{tpu_custom_call.1} parent=1 // pred_fallthru
      _
    %v12 = vld [vmem:[%s0] sm:$0xff]
    %v13 = vld [vmem:[%s0 + $0x8] sm:$0xff]
    %v14 = vld [vmem:[%s0 + $0x10] sm:$0xff]
    %v15 = vld [vmem:[%s0 + $0x18] sm:$0xff]
    %v16 = vld [vmem:[%s0 + $0x20] sm:$0xff]
    %v17 = vld [vmem:[%s0 + $0x28] sm:$0xff]
    %v18 = vld [vmem:[%s0 + $0x30] sm:$0xff]
    %v19 = vld [vmem:[%s0 + $0x38] sm:$0xff]
    %v20 = vld [vmem:[%s0 + $0x40] sm:$0xff]
    %v21 = vld [vmem:[%s0 + $0x48] sm:$0xff]
    %v22 = vld [vmem:[%s0 + $0x50] sm:$0xff]
    %v23 = vld [vmem:[%s0 + $0x58] sm:$0xff]
    %v24 = vld [vmem:[%s0 + $0x60] sm:$0xff]
    %v25 = vld [vmem:[%s0 + $0x68] sm:$0xff]
    %v26 = vld [vmem:[%s0 + $0x70] sm:$0xff]
    %v27 = vld [vmem:[%s0 + $0x78] sm:$0xff]
    %v28 = vld [vmem:[%s0 + $0x80] sm:$0xff]
    %v29 = vld [vmem:[%s0 + $0x88] sm:$0xff]
    %v30 = vld [vmem:[%s0 + $0x90] sm:$0xff]
    %v31 = vld [vmem:[%s0 + $0x98] sm:$0xff]
    %v32 = vld [vmem:[%s0 + $0xa0] sm:$0xff]
    %v33 = vld [vmem:[%s0 + $0xa8] sm:$0xff]
    %v34 = vld [vmem:[%s0 + $0xb0] sm:$0xff]
    %v35 = vld [vmem:[%s0 + $0xb8] sm:$0xff]
    %v36 = vld [vmem:[%s0 + $0xc0] sm:$0xff]
    %v37 = vld [vmem:[%s0 + $0xc8] sm:$0xff]
    %v38 = vld [vmem:[%s0 + $0xd0] sm:$0xff]
    %v39 = vld [vmem:[%s0 + $0xd8] sm:$0xff]
    %v40 = vld [vmem:[%s0 + $0xe0] sm:$0xff]
    %v41 = vld [vmem:[%s0 + $0xe8] sm:$0xff]
    %v42 = vld [vmem:[%s0 + $0xf0] sm:$0xff]
    %v43 = vld [vmem:[%s0 + $0xf8] sm:$0xff]
    %v44 = vld [vmem:[%s1] sm:$0xff]
    %v45 = vld [vmem:[%s1 + $0x8] sm:$0xff]
    %v46 = vld [vmem:[%s1 + $0x10] sm:$0xff]
    %v47 = vld [vmem:[%s1 + $0x18] sm:$0xff]
    %v48 = vld [vmem:[%s1 + $0x20] sm:$0xff]
    %v49 = vld [vmem:[%s1 + $0x28] sm:$0xff]
    %v50 = vld [vmem:[%s1 + $0x30] sm:$0xff]
    %v51 = vld [vmem:[%s1 + $0x38] sm:$0xff]
    %vm52 = vcmask 261120
    %v54 = vsel %vm52, %v12, 0
    %v57 = vsel %vm52, %v13, 0
    %v60 = vsel %vm52, %v14, 0
    %v63 = vsel %vm52, %v15, 0
    %v66 = vsel %vm52, %v16, 0
    %v69 = vsel %vm52, %v17, 0
    %v72 = vsel %vm52, %v18, 0
    %v75 = vsel %vm52, %v19, 0
    %v78 = vsel %vm52, %v20, 0
    %v81 = vsel %vm52, %v21, 0
    %v84 = vsel %vm52, %v22, 0
    %v87 = vsel %vm52, %v23, 0
    %v90 = vsel %vm52, %v24, 0
    %v93 = vsel %vm52, %v25, 0
    %v96 = vsel %vm52, %v26, 0
    %v99 = vsel %vm52, %v27, 0
    %v102 = vsel %vm52, %v28, 0
    %v105 = vsel %vm52, %v29, 0
    %v108 = vsel %vm52, %v30, 0
    %v111 = vsel %vm52, %v31, 0
    %v114 = vsel %vm52, %v32, 0
    %v117 = vsel %vm52, %v33, 0
    %v120 = vsel %vm52, %v34, 0
    %v123 = vsel %vm52, %v35, 0
    %v126 = vsel %vm52, %v36, 0
    %v129 = vsel %vm52, %v37, 0
    %v132 = vsel %vm52, %v38, 0
    %v135 = vsel %vm52, %v39, 0
    %v138 = vsel %vm52, %v40, 0
    %v141 = vsel %vm52, %v41, 0
    %v144 = vsel %vm52, %v42, 0
    %v147 = vsel %vm52, %v43, 0
    %149 = vmatprep.subr.mxu0 %v45
    %150 = vmatpush1.msra.mxu0 %v44
    %151 = vmatprep.subr.mxu0 %v47
    %152 = vmatpush1.msra.mxu0 %v46
    %153 = vmatprep.subr.mxu0 %v49
    %154 = vmatpush1.msra.mxu0 %v48
    %155 = vmatprep.subr.mxu0 %v51
    %156 = vmatpush1.msra.mxu0 %v50
    %157 = vmatprep.subr.mxu0 0.0
    %158 = vmatpush1.msra.mxu0 0.0
    %159 = vmatprep.subr.mxu0 0.0
    %160 = vmatpush1.msra.mxu0 0.0
    %161 = vmatprep.subr.mxu0 0.0
    %162 = vmatpush1.msra.mxu0 0.0
    %163 = vmatprep.subr.mxu0 0.0
    %164 = vmatpush1.msra.mxu0 0.0
    %165 = vmatprep.subr.mxu0 0.0
    %166 = vmatpush1.msra.mxu0 0.0
    %167 = vmatprep.subr.mxu0 0.0
    %168 = vmatpush1.msra.mxu0 0.0
    %169 = vmatprep.subr.mxu0 0.0
    %170 = vmatpush1.msra.mxu0 0.0
    %171 = vmatprep.subr.mxu0 0.0
    %172 = vmatpush1.msra.mxu0 0.0
    %173 = vmatprep.subr.mxu0 0.0
    %174 = vmatpush1.msra.mxu0 0.0
    %175 = vmatprep.subr.mxu0 0.0
    %176 = vmatpush1.msra.mxu0 0.0
    %177 = vmatprep.subr.mxu0 0.0
    %178 = vmatpush1.msra.mxu0 0.0
    %179 = vmatprep.subr.mxu0 0.0
    %180 = vmatpush1.msra.mxu0 0.0
    %181 = vmatprep.subr.mxu0 0.0
    %182 = vmatpush1.msra.mxu0 0.0
    %183 = vmatprep.subr.mxu0 0.0
    %184 = vmatpush1.msra.mxu0 0.0
    %185 = vmatprep.subr.mxu0 0.0
    %186 = vmatpush1.msra.mxu0 0.0
    %187 = vmatprep.subr.mxu0 0.0
    %188 = vmatpush1.msra.mxu0 0.0
    %189 = vmatprep.subr.mxu0 0.0
    %190 = vmatpush1.msra.mxu0 0.0
    %191 = vmatprep.subr.mxu0 0.0
    %192 = vmatpush1.msra.mxu0 0.0
    %193 = vmatprep.subr.mxu0 0.0
    %194 = vmatpush1.msra.mxu0 0.0
    %195 = vmatprep.subr.mxu0 0.0
    %196 = vmatpush1.msra.mxu0 0.0
    %197 = vmatprep.subr.mxu0 0.0
    %198 = vmatpush1.msra.mxu0 0.0
    %199 = vmatprep.subr.mxu0 0.0
    %200 = vmatpush1.msra.mxu0 0.0
    %201 = vmatprep.subr.mxu0 0.0
    %202 = vmatpush1.msra.mxu0 0.0
    %203 = vmatprep.subr.mxu0 0.0
    %204 = vmatpush1.msra.mxu0 0.0
    %205 = vmatprep.subr.mxu0 0.0
    %206 = vmatpush1.msra.mxu0 0.0
    %207 = vmatprep.subr.mxu0 0.0
    %208 = vmatpush1.msra.mxu0 0.0
    %209 = vmatprep.subr.mxu0 0.0
    %210 = vmatpush1.msra.mxu0 0.0
    %211 = vmatprep.subr.mxu0 0.0
    %212 = vmatpush1.msra.mxu0 0.0
    %213 = vmatprep.mubr.f32.mxu0 0.0
    %214 = vmatmul.mubr.f32.gmra.mrb[0].mxu0 %v54
    %v215 = vpop.f32.mrb[0].mxu0
    %v216 = vadd.f32 0.0, %v215
    %v217 = vpop.f32.mrb[0].mxu0
    %v218 = vadd.f32 0.0, %v217
    %219 = vmatprep.mubr.f32.mxu0 0.0
    %220 = vmatmul.mubr.f32.gmra.mrb[0].mxu0 %v57
    %v221 = vpop.f32.mrb[0].mxu0
    %v222 = vadd.f32 0.0, %v221
    %v223 = vpop.f32.mrb[0].mxu0
    %v224 = vadd.f32 0.0, %v223
    %225 = vmatprep.mubr.f32.mxu0 0.0
    %226 = vmatmul.mubr.f32.gmra.mrb[0].mxu0 %v60
    %v227 = vpop.f32.mrb[0].mxu0
    %v228 = vadd.f32 0.0, %v227
    %v229 = vpop.f32.mrb[0].mxu0
    %v230 = vadd.f32 0.0, %v229
    %231 = vmatprep.mubr.f32.mxu0 0.0
    %232 = vmatmul.mubr.f32.gmra.mrb[0].mxu0 %v63
    %v233 = vpop.f32.mrb[0].mxu0
    %v234 = vadd.f32 0.0, %v233
    %v235 = vpop.f32.mrb[0].mxu0
    %v236 = vadd.f32 0.0, %v235
    %237 = vmatprep.mubr.f32.mxu0 0.0
    %238 = vmatmul.mubr.f32.gmra.mrb[0].mxu0 %v66
    %v239 = vpop.f32.mrb[0].mxu0
    %v240 = vadd.f32 0.0, %v239
    %v241 = vpop.f32.mrb[0].mxu0
    %v242 = vadd.f32 0.0, %v241
    %243 = vmatprep.mubr.f32.mxu0 0.0
    %244 = vmatmul.mubr.f32.gmra.mrb[0].mxu0 %v69
    %v245 = vpop.f32.mrb[0].mxu0
    %v246 = vadd.f32 0.0, %v245
    %v247 = vpop.f32.mrb[0].mxu0
    %v248 = vadd.f32 0.0, %v247
    %249 = vmatprep.mubr.f32.mxu0 0.0
    %250 = vmatmul.mubr.f32.gmra.mrb[0].mxu0 %v72
    %v251 = vpop.f32.mrb[0].mxu0
    %v252 = vadd.f32 0.0, %v251
    %v253 = vpop.f32.mrb[0].mxu0
    %v254 = vadd.f32 0.0, %v253
    %255 = vmatprep.mubr.f32.mxu0 0.0
    %256 = vmatmul.mubr.f32.gmra.mrb[0].mxu0 %v75
    %v257 = vpop.f32.mrb[0].mxu0
    %v258 = vadd.f32 0.0, %v257
    %v259 = vpop.f32.mrb[0].mxu0
    %v260 = vadd.f32 0.0, %v259
    %261 = vmatprep.mubr.f32.mxu0 0.0
    %262 = vmatmul.mubr.f32.gmra.mrb[0].mxu0 %v78
    %v263 = vpop.f32.mrb[0].mxu0
    %v264 = vadd.f32 0.0, %v263
    %v265 = vpop.f32.mrb[0].mxu0
    %v266 = vadd.f32 0.0, %v265
    %267 = vmatprep.mubr.f32.mxu0 0.0
    %268 = vmatmul.mubr.f32.gmra.mrb[0].mxu0 %v81
    %v269 = vpop.f32.mrb[0].mxu0
    %v270 = vadd.f32 0.0, %v269
    %v271 = vpop.f32.mrb[0].mxu0
    %v272 = vadd.f32 0.0, %v271
    %273 = vmatprep.mubr.f32.mxu0 0.0
    %274 = vmatmul.mubr.f32.gmra.mrb[0].mxu0 %v84
    %v275 = vpop.f32.mrb[0].mxu0
    %v276 = vadd.f32 0.0, %v275
    %v277 = vpop.f32.mrb[0].mxu0
    %v278 = vadd.f32 0.0, %v277
    %279 = vmatprep.mubr.f32.mxu0 0.0
    %280 = vmatmul.mubr.f32.gmra.mrb[0].mxu0 %v87
    %v281 = vpop.f32.mrb[0].mxu0
    %v282 = vadd.f32 0.0, %v281
    %v283 = vpop.f32.mrb[0].mxu0
    %v284 = vadd.f32 0.0, %v283
    %285 = vmatprep.mubr.f32.mxu0 0.0
    %286 = vmatmul.mubr.f32.gmra.mrb[0].mxu0 %v90
    %v287 = vpop.f32.mrb[0].mxu0
    %v288 = vadd.f32 0.0, %v287
    %v289 = vpop.f32.mrb[0].mxu0
    %v290 = vadd.f32 0.0, %v289
    %291 = vmatprep.mubr.f32.mxu0 0.0
    %292 = vmatmul.mubr.f32.gmra.mrb[0].mxu0 %v93
    %v293 = vpop.f32.mrb[0].mxu0
    %v294 = vadd.f32 0.0, %v293
    %v295 = vpop.f32.mrb[0].mxu0
    %v296 = vadd.f32 0.0, %v295
    %297 = vmatprep.mubr.f32.mxu0 0.0
    %298 = vmatmul.mubr.f32.gmra.mrb[0].mxu0 %v96
    %v299 = vpop.f32.mrb[0].mxu0
    %v300 = vadd.f32 0.0, %v299
    %v301 = vpop.f32.mrb[0].mxu0
    %v302 = vadd.f32 0.0, %v301
    %303 = vmatprep.mubr.f32.mxu0 0.0
    %304 = vmatmul.mubr.f32.gmra.mrb[0].mxu0 %v99
    %v305 = vpop.f32.mrb[0].mxu0
    %v306 = vadd.f32 0.0, %v305
    %v307 = vpop.f32.mrb[0].mxu0
    %v308 = vadd.f32 0.0, %v307
    %309 = vmatprep.mubr.f32.mxu0 0.0
    %310 = vmatmul.mubr.f32.gmra.mrb[0].mxu0 %v102
    %v311 = vpop.f32.mrb[0].mxu0
    %v312 = vadd.f32 0.0, %v311
    %v313 = vpop.f32.mrb[0].mxu0
    %v314 = vadd.f32 0.0, %v313
    %315 = vmatprep.mubr.f32.mxu0 0.0
    %316 = vmatmul.mubr.f32.gmra.mrb[0].mxu0 %v105
    %v317 = vpop.f32.mrb[0].mxu0
    %v318 = vadd.f32 0.0, %v317
    %v319 = vpop.f32.mrb[0].mxu0
    %v320 = vadd.f32 0.0, %v319
    %321 = vmatprep.mubr.f32.mxu0 0.0
    %322 = vmatmul.mubr.f32.gmra.mrb[0].mxu0 %v108
    %v323 = vpop.f32.mrb[0].mxu0
    %v324 = vadd.f32 0.0, %v323
    %v325 = vpop.f32.mrb[0].mxu0
    %v326 = vadd.f32 0.0, %v325
    %327 = vmatprep.mubr.f32.mxu0 0.0
    %328 = vmatmul.mubr.f32.gmra.mrb[0].mxu0 %v111
    %v329 = vpop.f32.mrb[0].mxu0
    %v330 = vadd.f32 0.0, %v329
    %v331 = vpop.f32.mrb[0].mxu0
    %v332 = vadd.f32 0.0, %v331
    %333 = vmatprep.mubr.f32.mxu0 0.0
    %334 = vmatmul.mubr.f32.gmra.mrb[0].mxu0 %v114
    %v335 = vpop.f32.mrb[0].mxu0
    %v336 = vadd.f32 0.0, %v335
    %v337 = vpop.f32.mrb[0].mxu0
    %v338 = vadd.f32 0.0, %v337
    %339 = vmatprep.mubr.f32.mxu0 0.0
    %340 = vmatmul.mubr.f32.gmra.mrb[0].mxu0 %v117
    %v341 = vpop.f32.mrb[0].mxu0
    %v342 = vadd.f32 0.0, %v341
    %v343 = vpop.f32.mrb[0].mxu0
    %v344 = vadd.f32 0.0, %v343
    %345 = vmatprep.mubr.f32.mxu0 0.0
    %346 = vmatmul.mubr.f32.gmra.mrb[0].mxu0 %v120
    %v347 = vpop.f32.mrb[0].mxu0
    %v348 = vadd.f32 0.0, %v347
    %v349 = vpop.f32.mrb[0].mxu0
    %v350 = vadd.f32 0.0, %v349
    %351 = vmatprep.mubr.f32.mxu0 0.0
    %352 = vmatmul.mubr.f32.gmra.mrb[0].mxu0 %v123
    %v353 = vpop.f32.mrb[0].mxu0
    %v354 = vadd.f32 0.0, %v353
    %v355 = vpop.f32.mrb[0].mxu0
    %v356 = vadd.f32 0.0, %v355
    %357 = vmatprep.mubr.f32.mxu0 0.0
    %358 = vmatmul.mubr.f32.gmra.mrb[0].mxu0 %v126
    %v359 = vpop.f32.mrb[0].mxu0
    %v360 = vadd.f32 0.0, %v359
    %v361 = vpop.f32.mrb[0].mxu0
    %v362 = vadd.f32 0.0, %v361
    %363 = vmatprep.mubr.f32.mxu0 0.0
    %364 = vmatmul.mubr.f32.gmra.mrb[0].mxu0 %v129
    %v365 = vpop.f32.mrb[0].mxu0
    %v366 = vadd.f32 0.0, %v365
    %v367 = vpop.f32.mrb[0].mxu0
    %v368 = vadd.f32 0.0, %v367
    %369 = vmatprep.mubr.f32.mxu0 0.0
    %370 = vmatmul.mubr.f32.gmra.mrb[0].mxu0 %v132
    %v371 = vpop.f32.mrb[0].mxu0
    %v372 = vadd.f32 0.0, %v371
    %v373 = vpop.f32.mrb[0].mxu0
    %v374 = vadd.f32 0.0, %v373
    %375 = vmatprep.mubr.f32.mxu0 0.0
    %376 = vmatmul.mubr.f32.gmra.mrb[0].mxu0 %v135
    %v377 = vpop.f32.mrb[0].mxu0
    %v378 = vadd.f32 0.0, %v377
    %v379 = vpop.f32.mrb[0].mxu0
    %v380 = vadd.f32 0.0, %v379
    %381 = vmatprep.mubr.f32.mxu0 0.0
    %382 = vmatmul.mubr.f32.gmra.mrb[0].mxu0 %v138
    %v383 = vpop.f32.mrb[0].mxu0
    %v384 = vadd.f32 0.0, %v383
    %v385 = vpop.f32.mrb[0].mxu0
    %v386 = vadd.f32 0.0, %v385
    %387 = vmatprep.mubr.f32.mxu0 0.0
    %388 = vmatmul.mubr.f32.gmra.mrb[0].mxu0 %v141
    %v389 = vpop.f32.mrb[0].mxu0
    %v390 = vadd.f32 0.0, %v389
    %v391 = vpop.f32.mrb[0].mxu0
    %v392 = vadd.f32 0.0, %v391
    %393 = vmatprep.mubr.f32.mxu0 0.0
    %394 = vmatmul.mubr.f32.gmra.mrb[0].mxu0 %v144
    %v395 = vpop.f32.mrb[0].mxu0
    %v396 = vadd.f32 0.0, %v395
    %v397 = vpop.f32.mrb[0].mxu0
    %v398 = vadd.f32 0.0, %v397
    %399 = vmatprep.mubr.f32.mxu0 0.0
    %400 = vmatmul.mubr.f32.gmra.mrb[0].mxu0 %v147
    %v401 = vpop.f32.mrb[0].mxu0
    %v402 = vadd.f32 0.0, %v401
    %v403 = vpop.f32.mrb[0].mxu0
    %v404 = vadd.f32 0.0, %v403
    %405 = vdwg.mxu0
    %v406 = vxor.u32 %v216, 2147483648
    %v407 = vxor.u32 %v218, 2147483648
    %v408 = vxor.u32 %v222, 2147483648
    %v409 = vxor.u32 %v224, 2147483648
    %v410 = vxor.u32 %v228, 2147483648
    %v411 = vxor.u32 %v230, 2147483648
    %v412 = vxor.u32 %v234, 2147483648
    %v413 = vxor.u32 %v236, 2147483648
    %v414 = vxor.u32 %v240, 2147483648
    %v415 = vxor.u32 %v242, 2147483648
    %v416 = vxor.u32 %v246, 2147483648
    %v417 = vxor.u32 %v248, 2147483648
    %v418 = vxor.u32 %v252, 2147483648
    %v419 = vxor.u32 %v254, 2147483648
    %v420 = vxor.u32 %v258, 2147483648
    %v421 = vxor.u32 %v260, 2147483648
    %v422 = vxor.u32 %v264, 2147483648
    %v423 = vxor.u32 %v266, 2147483648
    %v424 = vxor.u32 %v270, 2147483648
    %v425 = vxor.u32 %v272, 2147483648
    %v426 = vxor.u32 %v276, 2147483648
    %v427 = vxor.u32 %v278, 2147483648
    %v428 = vxor.u32 %v282, 2147483648
    %v429 = vxor.u32 %v284, 2147483648
    %v430 = vxor.u32 %v288, 2147483648
    %v431 = vxor.u32 %v290, 2147483648
    %v432 = vxor.u32 %v294, 2147483648
    %v433 = vxor.u32 %v296, 2147483648
    %v434 = vxor.u32 %v300, 2147483648
    %v435 = vxor.u32 %v302, 2147483648
    %v436 = vxor.u32 %v306, 2147483648
    %v437 = vxor.u32 %v308, 2147483648
    %v438 = vxor.u32 %v312, 2147483648
    %v439 = vxor.u32 %v314, 2147483648
    %v440 = vxor.u32 %v318, 2147483648
    %v441 = vxor.u32 %v320, 2147483648
    %v442 = vxor.u32 %v324, 2147483648
    %v443 = vxor.u32 %v326, 2147483648
    %v444 = vxor.u32 %v330, 2147483648
    %v445 = vxor.u32 %v332, 2147483648
    %v446 = vxor.u32 %v336, 2147483648
    %v447 = vxor.u32 %v338, 2147483648
    %v448 = vxor.u32 %v342, 2147483648
    %v449 = vxor.u32 %v344, 2147483648
    %v450 = vxor.u32 %v348, 2147483648
    %v451 = vxor.u32 %v350, 2147483648
    %v452 = vxor.u32 %v354, 2147483648
    %v453 = vxor.u32 %v356, 2147483648
    %v454 = vxor.u32 %v360, 2147483648
    %v455 = vxor.u32 %v362, 2147483648
    %v456 = vxor.u32 %v366, 2147483648
    %v457 = vxor.u32 %v368, 2147483648
    %v458 = vxor.u32 %v372, 2147483648
    %v459 = vxor.u32 %v374, 2147483648
    %v460 = vxor.u32 %v378, 2147483648
    %v461 = vxor.u32 %v380, 2147483648
    %v462 = vxor.u32 %v384, 2147483648
    %v463 = vxor.u32 %v386, 2147483648
    %v464 = vxor.u32 %v390, 2147483648
    %v465 = vxor.u32 %v392, 2147483648
    %v466 = vxor.u32 %v396, 2147483648
    %v467 = vxor.u32 %v398, 2147483648
    %v468 = vxor.u32 %v402, 2147483648
    %v469 = vxor.u32 %v404, 2147483648
    %v470 = vmul.f32 %v406, 1.442695
    %v471 = vpow.pop %v470
    %v472 = vmul.f32 %v407, 1.442695
    %v473 = vpow.pop %v472
    %v474 = vmul.f32 %v408, 1.442695
    %v475 = vpow.pop %v474
    %v476 = vmul.f32 %v409, 1.442695
    %v477 = vpow.pop %v476
    %v478 = vmul.f32 %v410, 1.442695
    %v479 = vpow.pop %v478
    %v480 = vmul.f32 %v411, 1.442695
    %v481 = vpow.pop %v480
    %v482 = vmul.f32 %v412, 1.442695
    %v483 = vpow.pop %v482
    %v484 = vmul.f32 %v413, 1.442695
    %v485 = vpow.pop %v484
    %v486 = vmul.f32 %v414, 1.442695
    %v487 = vpow.pop %v486
    %v488 = vmul.f32 %v415, 1.442695
    %v489 = vpow.pop %v488
    %v490 = vmul.f32 %v416, 1.442695
    %v491 = vpow.pop %v490
    %v492 = vmul.f32 %v417, 1.442695
    %v493 = vpow.pop %v492
    %v494 = vmul.f32 %v418, 1.442695
    %v495 = vpow.pop %v494
    %v496 = vmul.f32 %v419, 1.442695
    %v497 = vpow.pop %v496
    %v498 = vmul.f32 %v420, 1.442695
    %v499 = vpow.pop %v498
    %v500 = vmul.f32 %v421, 1.442695
    %v501 = vpow.pop %v500
    %v502 = vmul.f32 %v422, 1.442695
    %v503 = vpow.pop %v502
    %v504 = vmul.f32 %v423, 1.442695
    %v505 = vpow.pop %v504
    %v506 = vmul.f32 %v424, 1.442695
    %v507 = vpow.pop %v506
    %v508 = vmul.f32 %v425, 1.442695
    %v509 = vpow.pop %v508
    %v510 = vmul.f32 %v426, 1.442695
    %v511 = vpow.pop %v510
    %v512 = vmul.f32 %v427, 1.442695
    %v513 = vpow.pop %v512
    %v514 = vmul.f32 %v428, 1.442695
    %v515 = vpow.pop %v514
    %v516 = vmul.f32 %v429, 1.442695
    %v517 = vpow.pop %v516
    %v518 = vmul.f32 %v430, 1.442695
    %v519 = vpow.pop %v518
    %v520 = vmul.f32 %v431, 1.442695
    %v521 = vpow.pop %v520
    %v522 = vmul.f32 %v432, 1.442695
    %v523 = vpow.pop %v522
    %v524 = vmul.f32 %v433, 1.442695
    %v525 = vpow.pop %v524
    %v526 = vmul.f32 %v434, 1.442695
    %v527 = vpow.pop %v526
    %v528 = vmul.f32 %v435, 1.442695
    %v529 = vpow.pop %v528
    %v530 = vmul.f32 %v436, 1.442695
    %v531 = vpow.pop %v530
    %v532 = vmul.f32 %v437, 1.442695
    %v533 = vpow.pop %v532
    %v534 = vmul.f32 %v438, 1.442695
    %v535 = vpow.pop %v534
    %v536 = vmul.f32 %v439, 1.442695
    %v537 = vpow.pop %v536
    %v538 = vmul.f32 %v440, 1.442695
    %v539 = vpow.pop %v538
    %v540 = vmul.f32 %v441, 1.442695
    %v541 = vpow.pop %v540
    %v542 = vmul.f32 %v442, 1.442695
    %v543 = vpow.pop %v542
    %v544 = vmul.f32 %v443, 1.442695
    %v545 = vpow.pop %v544
    %v546 = vmul.f32 %v444, 1.442695
    %v547 = vpow.pop %v546
    %v548 = vmul.f32 %v445, 1.442695
    %v549 = vpow.pop %v548
    %v550 = vmul.f32 %v446, 1.442695
    %v551 = vpow.pop %v550
    %v552 = vmul.f32 %v447, 1.442695
    %v553 = vpow.pop %v552
    %v554 = vmul.f32 %v448, 1.442695
    %v555 = vpow.pop %v554
    %v556 = vmul.f32 %v449, 1.442695
    %v557 = vpow.pop %v556
    %v558 = vmul.f32 %v450, 1.442695
    %v559 = vpow.pop %v558
    %v560 = vmul.f32 %v451, 1.442695
    %v561 = vpow.pop %v560
    %v562 = vmul.f32 %v452, 1.442695
    %v563 = vpow.pop %v562
    %v564 = vmul.f32 %v453, 1.442695
    %v565 = vpow.pop %v564
    %v566 = vmul.f32 %v454, 1.442695
    %v567 = vpow.pop %v566
    %v568 = vmul.f32 %v455, 1.442695
    %v569 = vpow.pop %v568
    %v570 = vmul.f32 %v456, 1.442695
    %v571 = vpow.pop %v570
    %v572 = vmul.f32 %v457, 1.442695
    %v573 = vpow.pop %v572
    %v574 = vmul.f32 %v458, 1.442695
    %v575 = vpow.pop %v574
    %v576 = vmul.f32 %v459, 1.442695
    %v577 = vpow.pop %v576
    %v578 = vmul.f32 %v460, 1.442695
    %v579 = vpow.pop %v578
    %v580 = vmul.f32 %v461, 1.442695
    %v581 = vpow.pop %v580
    %v582 = vmul.f32 %v462, 1.442695
    %v583 = vpow.pop %v582
    %v584 = vmul.f32 %v463, 1.442695
    %v585 = vpow.pop %v584
    %v586 = vmul.f32 %v464, 1.442695
    %v587 = vpow.pop %v586
    %v588 = vmul.f32 %v465, 1.442695
    %v589 = vpow.pop %v588
    %v590 = vmul.f32 %v466, 1.442695
    %v591 = vpow.pop %v590
    %v592 = vmul.f32 %v467, 1.442695
    %v593 = vpow.pop %v592
    %v594 = vmul.f32 %v468, 1.442695
    %v595 = vpow.pop %v594
    %v596 = vmul.f32 %v469, 1.442695
    %v597 = vpow.pop %v596
    %v598 = vadd.f32 %v471, 1.0
    %v599 = vadd.f32 %v473, 1.0
    %v600 = vadd.f32 %v475, 1.0
    %v601 = vadd.f32 %v477, 1.0
    %v602 = vadd.f32 %v479, 1.0
    %v603 = vadd.f32 %v481, 1.0
    %v604 = vadd.f32 %v483, 1.0
    %v605 = vadd.f32 %v485, 1.0
    %v606 = vadd.f32 %v487, 1.0
    %v607 = vadd.f32 %v489, 1.0
    %v608 = vadd.f32 %v491, 1.0
    %v609 = vadd.f32 %v493, 1.0
    %v610 = vadd.f32 %v495, 1.0
    %v611 = vadd.f32 %v497, 1.0
    %v612 = vadd.f32 %v499, 1.0
    %v613 = vadd.f32 %v501, 1.0
    %v614 = vadd.f32 %v503, 1.0
    %v615 = vadd.f32 %v505, 1.0
    %v616 = vadd.f32 %v507, 1.0
    %v617 = vadd.f32 %v509, 1.0
    %v618 = vadd.f32 %v511, 1.0
    %v619 = vadd.f32 %v513, 1.0
    %v620 = vadd.f32 %v515, 1.0
    %v621 = vadd.f32 %v517, 1.0
    %v622 = vadd.f32 %v519, 1.0
    %v623 = vadd.f32 %v521, 1.0
    %v624 = vadd.f32 %v523, 1.0
    %v625 = vadd.f32 %v525, 1.0
    %v626 = vadd.f32 %v527, 1.0
    %v627 = vadd.f32 %v529, 1.0
    %v628 = vadd.f32 %v531, 1.0
    %v629 = vadd.f32 %v533, 1.0
    %v630 = vadd.f32 %v535, 1.0
    %v631 = vadd.f32 %v537, 1.0
    %v632 = vadd.f32 %v539, 1.0
    %v633 = vadd.f32 %v541, 1.0
    %v634 = vadd.f32 %v543, 1.0
    %v635 = vadd.f32 %v545, 1.0
    %v636 = vadd.f32 %v547, 1.0
    %v637 = vadd.f32 %v549, 1.0
    %v638 = vadd.f32 %v551, 1.0
    %v639 = vadd.f32 %v553, 1.0
    %v640 = vadd.f32 %v555, 1.0
    %v641 = vadd.f32 %v557, 1.0
    %v642 = vadd.f32 %v559, 1.0
    %v643 = vadd.f32 %v561, 1.0
    %v644 = vadd.f32 %v563, 1.0
    %v645 = vadd.f32 %v565, 1.0
    %v646 = vadd.f32 %v567, 1.0
    %v647 = vadd.f32 %v569, 1.0
    %v648 = vadd.f32 %v571, 1.0
    %v649 = vadd.f32 %v573, 1.0
    %v650 = vadd.f32 %v575, 1.0
    %v651 = vadd.f32 %v577, 1.0
    %v652 = vadd.f32 %v579, 1.0
    %v653 = vadd.f32 %v581, 1.0
    %v654 = vadd.f32 %v583, 1.0
    %v655 = vadd.f32 %v585, 1.0
    %v656 = vadd.f32 %v587, 1.0
    %v657 = vadd.f32 %v589, 1.0
    %v658 = vadd.f32 %v591, 1.0
    %v659 = vadd.f32 %v593, 1.0
    %v660 = vadd.f32 %v595, 1.0
    %v661 = vadd.f32 %v597, 1.0
    %v662 = vrcp.pop %v598
    %v663 = vmul.f32 1.0, %v662
    %v664 = vrcp.pop %v599
    %v665 = vmul.f32 1.0, %v664
    %v666 = vrcp.pop %v600
    %v667 = vmul.f32 1.0, %v666
    %v668 = vrcp.pop %v601
    %v669 = vmul.f32 1.0, %v668
    %v670 = vrcp.pop %v602
    %v671 = vmul.f32 1.0, %v670
    %v672 = vrcp.pop %v603
    %v673 = vmul.f32 1.0, %v672
    %v674 = vrcp.pop %v604
    %v675 = vmul.f32 1.0, %v674
    %v676 = vrcp.pop %v605
    %v677 = vmul.f32 1.0, %v676
    %v678 = vrcp.pop %v606
    %v679 = vmul.f32 1.0, %v678
    %v680 = vrcp.pop %v607
    %v681 = vmul.f32 1.0, %v680
    %v682 = vrcp.pop %v608
    %v683 = vmul.f32 1.0, %v682
    %v684 = vrcp.pop %v609
    %v685 = vmul.f32 1.0, %v684
    %v686 = vrcp.pop %v610
    %v687 = vmul.f32 1.0, %v686
    %v688 = vrcp.pop %v611
    %v689 = vmul.f32 1.0, %v688
    %v690 = vrcp.pop %v612
    %v691 = vmul.f32 1.0, %v690
    %v692 = vrcp.pop %v613
    %v693 = vmul.f32 1.0, %v692
    %v694 = vrcp.pop %v614
    %v695 = vmul.f32 1.0, %v694
    %v696 = vrcp.pop %v615
    %v697 = vmul.f32 1.0, %v696
    %v698 = vrcp.pop %v616
    %v699 = vmul.f32 1.0, %v698
    %v700 = vrcp.pop %v617
    %v701 = vmul.f32 1.0, %v700
    %v702 = vrcp.pop %v618
    %v703 = vmul.f32 1.0, %v702
    %v704 = vrcp.pop %v619
    %v705 = vmul.f32 1.0, %v704
    %v706 = vrcp.pop %v620
    %v707 = vmul.f32 1.0, %v706
    %v708 = vrcp.pop %v621
    %v709 = vmul.f32 1.0, %v708
    %v710 = vrcp.pop %v622
    %v711 = vmul.f32 1.0, %v710
    %v712 = vrcp.pop %v623
    %v713 = vmul.f32 1.0, %v712
    %v714 = vrcp.pop %v624
    %v715 = vmul.f32 1.0, %v714
    %v716 = vrcp.pop %v625
    %v717 = vmul.f32 1.0, %v716
    %v718 = vrcp.pop %v626
    %v719 = vmul.f32 1.0, %v718
    %v720 = vrcp.pop %v627
    %v721 = vmul.f32 1.0, %v720
    %v722 = vrcp.pop %v628
    %v723 = vmul.f32 1.0, %v722
    %v724 = vrcp.pop %v629
    %v725 = vmul.f32 1.0, %v724
    %v726 = vrcp.pop %v630
    %v727 = vmul.f32 1.0, %v726
    %v728 = vrcp.pop %v631
    %v729 = vmul.f32 1.0, %v728
    %v730 = vrcp.pop %v632
    %v731 = vmul.f32 1.0, %v730
    %v732 = vrcp.pop %v633
    %v733 = vmul.f32 1.0, %v732
    %v734 = vrcp.pop %v634
    %v735 = vmul.f32 1.0, %v734
    %v736 = vrcp.pop %v635
    %v737 = vmul.f32 1.0, %v736
    %v738 = vrcp.pop %v636
    %v739 = vmul.f32 1.0, %v738
    %v740 = vrcp.pop %v637
    %v741 = vmul.f32 1.0, %v740
    %v742 = vrcp.pop %v638
    %v743 = vmul.f32 1.0, %v742
    %v744 = vrcp.pop %v639
    %v745 = vmul.f32 1.0, %v744
    %v746 = vrcp.pop %v640
    %v747 = vmul.f32 1.0, %v746
    %v748 = vrcp.pop %v641
    %v749 = vmul.f32 1.0, %v748
    %v750 = vrcp.pop %v642
    %v751 = vmul.f32 1.0, %v750
    %v752 = vrcp.pop %v643
    %v753 = vmul.f32 1.0, %v752
    %v754 = vrcp.pop %v644
    %v755 = vmul.f32 1.0, %v754
    %v756 = vrcp.pop %v645
    %v757 = vmul.f32 1.0, %v756
    %v758 = vrcp.pop %v646
    %v759 = vmul.f32 1.0, %v758
    %v760 = vrcp.pop %v647
    %v761 = vmul.f32 1.0, %v760
    %v762 = vrcp.pop %v648
    %v763 = vmul.f32 1.0, %v762
    %v764 = vrcp.pop %v649
    %v765 = vmul.f32 1.0, %v764
    %v766 = vrcp.pop %v650
    %v767 = vmul.f32 1.0, %v766
    %v768 = vrcp.pop %v651
    %v769 = vmul.f32 1.0, %v768
    %v770 = vrcp.pop %v652
    %v771 = vmul.f32 1.0, %v770
    %v772 = vrcp.pop %v653
    %v773 = vmul.f32 1.0, %v772
    %v774 = vrcp.pop %v654
    %v775 = vmul.f32 1.0, %v774
    %v776 = vrcp.pop %v655
    %v777 = vmul.f32 1.0, %v776
    %v778 = vrcp.pop %v656
    %v779 = vmul.f32 1.0, %v778
    %v780 = vrcp.pop %v657
    %v781 = vmul.f32 1.0, %v780
    %v782 = vrcp.pop %v658
    %v783 = vmul.f32 1.0, %v782
    %v784 = vrcp.pop %v659
    %v785 = vmul.f32 1.0, %v784
    %v786 = vrcp.pop %v660
    %v787 = vmul.f32 1.0, %v786
    %v788 = vrcp.pop %v661
    %v789 = vmul.f32 1.0, %v788
    %790 = vst [vmem:[#allocation2] sm:$0xff] %v663
    %791 = vst [vmem:[#allocation2 + $0x8] sm:$0xff] %v665
    %792 = vst [vmem:[#allocation2 + $0x10] sm:$0xff] %v667
    %793 = vst [vmem:[#allocation2 + $0x18] sm:$0xff] %v669
    %794 = vst [vmem:[#allocation2 + $0x20] sm:$0xff] %v671
    %795 = vst [vmem:[#allocation2 + $0x28] sm:$0xff] %v673
    %796 = vst [vmem:[#allocation2 + $0x30] sm:$0xff] %v675
    %797 = vst [vmem:[#allocation2 + $0x38] sm:$0xff] %v677
    %798 = vst [vmem:[#allocation2 + $0x40] sm:$0xff] %v679
    %799 = vst [vmem:[#allocation2 + $0x48] sm:$0xff] %v681
    %800 = vst [vmem:[#allocation2 + $0x50] sm:$0xff] %v683
    %801 = vst [vmem:[#allocation2 + $0x58] sm:$0xff] %v685
    %802 = vst [vmem:[#allocation2 + $0x60] sm:$0xff] %v687
    %803 = vst [vmem:[#allocation2 + $0x68] sm:$0xff] %v689
    %804 = vst [vmem:[#allocation2 + $0x70] sm:$0xff] %v691
    %805 = vst [vmem:[#allocation2 + $0x78] sm:$0xff] %v693
    %806 = vst [vmem:[#allocation2 + $0x80] sm:$0xff] %v695
    %807 = vst [vmem:[#allocation2 + $0x88] sm:$0xff] %v697
    %808 = vst [vmem:[#allocation2 + $0x90] sm:$0xff] %v699
    %809 = vst [vmem:[#allocation2 + $0x98] sm:$0xff] %v701
    %810 = vst [vmem:[#allocation2 + $0xa0] sm:$0xff] %v703
    %811 = vst [vmem:[#allocation2 + $0xa8] sm:$0xff] %v705
    %812 = vst [vmem:[#allocation2 + $0xb0] sm:$0xff] %v707
    %813 = vst [vmem:[#allocation2 + $0xb8] sm:$0xff] %v709
    %814 = vst [vmem:[#allocation2 + $0xc0] sm:$0xff] %v711
    %815 = vst [vmem:[#allocation2 + $0xc8] sm:$0xff] %v713
    %816 = vst [vmem:[#allocation2 + $0xd0] sm:$0xff] %v715
    %817 = vst [vmem:[#allocation2 + $0xd8] sm:$0xff] %v717
    %818 = vst [vmem:[#allocation2 + $0xe0] sm:$0xff] %v719
    %819 = vst [vmem:[#allocation2 + $0xe8] sm:$0xff] %v721
    %820 = vst [vmem:[#allocation2 + $0xf0] sm:$0xff] %v723
    %821 = vst [vmem:[#allocation2 + $0xf8] sm:$0xff] %v725
    %822 = vst [vmem:[#allocation2 + $0x100] sm:$0xff] %v727
    %823 = vst [vmem:[#allocation2 + $0x108] sm:$0xff] %v729
    %824 = vst [vmem:[#allocation2 + $0x110] sm:$0xff] %v731
    %825 = vst [vmem:[#allocation2 + $0x118] sm:$0xff] %v733
    %826 = vst [vmem:[#allocation2 + $0x120] sm:$0xff] %v735
    %827 = vst [vmem:[#allocation2 + $0x128] sm:$0xff] %v737
    %828 = vst [vmem:[#allocation2 + $0x130] sm:$0xff] %v739
    %829 = vst [vmem:[#allocation2 + $0x138] sm:$0xff] %v741
    %830 = vst [vmem:[#allocation2 + $0x140] sm:$0xff] %v743
    %831 = vst [vmem:[#allocation2 + $0x148] sm:$0xff] %v745
    %832 = vst [vmem:[#allocation2 + $0x150] sm:$0xff] %v747
    %833 = vst [vmem:[#allocation2 + $0x158] sm:$0xff] %v749
    %834 = vst [vmem:[#allocation2 + $0x160] sm:$0xff] %v751
    %835 = vst [vmem:[#allocation2 + $0x168] sm:$0xff] %v753
    %836 = vst [vmem:[#allocation2 + $0x170] sm:$0xff] %v755
    %837 = vst [vmem:[#allocation2 + $0x178] sm:$0xff] %v757
    %838 = vst [vmem:[#allocation2 + $0x180] sm:$0xff] %v759
    %839 = vst [vmem:[#allocation2 + $0x188] sm:$0xff] %v761
    %840 = vst [vmem:[#allocation2 + $0x190] sm:$0xff] %v763
    %841 = vst [vmem:[#allocation2 + $0x198] sm:$0xff] %v765
    %842 = vst [vmem:[#allocation2 + $0x1a0] sm:$0xff] %v767
    %843 = vst [vmem:[#allocation2 + $0x1a8] sm:$0xff] %v769
    %844 = vst [vmem:[#allocation2 + $0x1b0] sm:$0xff] %v771
    %845 = vst [vmem:[#allocation2 + $0x1b8] sm:$0xff] %v773
    %846 = vst [vmem:[#allocation2 + $0x1c0] sm:$0xff] %v775
    %847 = vst [vmem:[#allocation2 + $0x1c8] sm:$0xff] %v777
    %848 = vst [vmem:[#allocation2 + $0x1d0] sm:$0xff] %v779
    %849 = vst [vmem:[#allocation2 + $0x1d8] sm:$0xff] %v781
    %850 = vst [vmem:[#allocation2 + $0x1e0] sm:$0xff] %v783
    %851 = vst [vmem:[#allocation2 + $0x1e8] sm:$0xff] %v785
    %852 = vst [vmem:[#allocation2 + $0x1f0] sm:$0xff] %v787
    %853 = vst [vmem:[#allocation2 + $0x1f8] sm:$0xff] %v789
    // Predicated region
    $region10: #{tpu_custom_call.1} parent=1 // pred_check
      _
    $region11: #{tpu_custom_call.1} parent=1 // pred_check_branch
      %855 = sbr.rel (0) target = $region13
    $region12: #{tpu_custom_call.1} parent=1 // pred_region
      %s857 = ssub.s32 8192, 8192
      %858 = vsyncadd [#allocation3], %s857
      %s859 = sshll.u32 [#allocation2], 4
      %s860 = int_to_ptr.vmem [resolvable:$true] %s859
      %865 = dma.vmem_to_hbm [thread:$0]  %s860, 8192, %s2, [#allocation3], 256, 256, 16
    $region13: #{tpu_custom_call.1} parent=1 // pred_fallthru
      _
    // Predicated region
    $region14: #{tpu_custom_call.1} parent=1 // pred_check
      _
    $region15: #{tpu_custom_call.1} parent=1 // pred_check_branch
      %867 = sbr.rel (0) target = $region17
    $region16: #{tpu_custom_call.1} parent=1 // pred_region
      %868 = dma.done [#allocation3], 8192
    $region17: #{tpu_custom_call.1} parent=1 // pred_fallthru
      _
    %869 = vsyncpa [#allocation3], 1

</llo_original>
